<compile_context>
chip_gen: v6e
topology: v6e:2x2x1
jax: 0.10.0
libtpu: 0.0.40
codegen_flags: <defaults>
</compile_context>

<pallas_src>
import functools

import jax
import jax.numpy as jnp
from jax.experimental import pallas as pl
from jax.experimental.pallas import tpu as pltpu


def _round_up(a: int, b: int) -> int:
    return (a + b - 1) // b * b


def _tri_loss_kernel(x_i_ref, sq_i_ref, t_i_ref,
                     x_j_ref, sq_j_ref, t_j_ref,
                     o_ref, sum_acc, cnt_acc, *, n_real, tm, tn):
    i = pl.program_id(0)      # row tile   ("parallel")
    j = pl.program_id(1)      # column tile ("arbitrary", innermost reduction)

    @pl.when(j == 0)
    def _():
        sum_acc[...] = jnp.zeros_like(sum_acc)
        cnt_acc[...] = jnp.zeros_like(cnt_acc)

    # Gram block on the MXU, contracting the feature dim of BOTH operands
    # (no transposed copy of x through the XLU).
    gram = jax.lax.dot_general(
        x_i_ref[...], x_j_ref[...],
        dimension_numbers=(((1,), (1,)), ((), ())),
        preferred_element_type=jnp.float32)                    # (tm, tn)

    # ||xi - xj||^2 from precomputed squared norms -> pure VPU broadcast-add.
    d2 = sq_i_ref[...] + sq_j_ref[...] - 2.0 * gram

    row_idx = i * tm + jax.lax.broadcasted_iota(jnp.int32, (tm, 1), 0)
    col_idx = j * tn + jax.lax.broadcasted_iota(jnp.int32, (1, tn), 1)

    # Exact-arithmetic diagonal is 0; force it so last-ulp cancellation noise
    # is not amplified by the nested sqrt (clamp floor then applies exactly).
    d2 = jnp.where(row_idx == col_idx, 0.0, d2)

    dist_vm = jnp.sqrt(jnp.maximum(d2, 1e-12))
    # Reference quirk kept: dist_nm = sqrt(clamp(dist_vm, 1e-12)); the inner
    # clamp is dead since dist_vm >= 1e-6, so it is dropped.
    diff = dist_vm - jnp.sqrt(dist_vm)

    # mask[i, j] = (t_i == t_j) and column j is a real (unpadded) sample.
    mask = jnp.logical_and(t_i_ref[...] == t_j_ref[...], col_idx < n_real)

    cnt_acc[...] = cnt_acc[...] + jnp.sum(
        mask.astype(jnp.float32), axis=1, keepdims=True)
    sum_acc[...] = sum_acc[...] + jnp.sum(
        jnp.where(mask, diff, 0.0), axis=1, keepdims=True)

    @pl.when(j == pl.num_programs(1) - 1)
    def _():
        contrib = sum_acc[...] / jnp.maximum(cnt_acc[...], 1.0)   # (tm, 1)
        contrib = jnp.where(row_idx < n_real, contrib, 0.0)       # padded rows
        o_ref[...] = jnp.full((1, 8, 128), jnp.sum(contrib), jnp.float32)


def tri_loss(inputs, targets, margin=0.3, block_size=256):
    """Pallas implementation of TriLoss.forward (the returned loss value).

    inputs:  (4*B, D) float array, targets: (2*B,) integer identity labels.
    margin / ranking_loss do not affect the returned value (matches PyTorch).
    block_size: distance-matrix tile edge; 256 is cross-generation safe
    (v7x 64 MiB VMEM), 512 amortizes per-step overhead better on v5e/v6e.
    """
    four_b, d = inputs.shape
    assert four_b % 4 == 0
    vis, vtm, nir, ntm = jnp.split(inputs, 4, axis=0)
    # TODO(synk): the concat+pad HBM round trip could be removed by remapping
    # row/col block indices straight into `inputs`, but it is a one-off
    # O(n*d) cost vs the kernel's O(n^2/tile * d) streaming reads.
    x = jnp.concatenate([vis, ntm], axis=0).astype(jnp.float32)      # (n, d)
    n = x.shape[0]
    assert targets.shape[0] == n, "targets must have length 2*B"

    # Square tiles so one padded size serves both the row and column tiling.
    # Multi-tile blocks must be (8, 128)-aligned; a single full-extent tile
    # only needs sublane (8) alignment.
    blk = max(128, _round_up(block_size, 128))
    if n <= blk:
        tm = tn = _round_up(n, 8)
        n_pad = tm
    else:
        tm = tn = blk
        n_pad = _round_up(n, blk)
    n_row_tiles = n_pad // tm
    n_col_tiles = n_pad // tn

    pad = n_pad - n
    t = targets.astype(jnp.int32)
    if pad:
        x = jnp.pad(x, ((0, pad), (0, 0)))
        t = jnp.pad(t, (0, pad), constant_values=-1)

    # Squared row norms precomputed once; both layouts provided so the kernel
    # never transposes.
    sq = jnp.sum(x * x, axis=1)
    sq_i = sq.reshape(n_pad, 1)       # row-slab layout   (tm, 1) tiles
    sq_j = sq.reshape(1, n_pad)       # column-slab layout (1, tn) tiles
    t_i = t.reshape(n_pad, 1)
    t_j = t.reshape(1, n_pad)

    kernel = functools.partial(_tri_loss_kernel, n_real=n, tm=tm, tn=tn)

    partials = pl.pallas_call(
        kernel,
        out_shape=jax.ShapeDtypeStruct((n_row_tiles, 8, 128), jnp.float32),
        grid=(n_row_tiles, n_col_tiles),
        in_specs=[
            pl.BlockSpec((tm, d), lambda i, j: (i, 0)),    # x row slab
            pl.BlockSpec((tm, 1), lambda i, j: (i, 0)),    # sq row slab
            pl.BlockSpec((tm, 1), lambda i, j: (i, 0)),    # labels row slab
            pl.BlockSpec((tn, d), lambda i, j: (j, 0)),    # x column slab
            pl.BlockSpec((1, tn), lambda i, j: (0, j)),    # sq column slab
            pl.BlockSpec((1, tn), lambda i, j: (0, j)),    # labels column slab
        ],
        out_specs=pl.BlockSpec((1, 8, 128), lambda i, j: (i, 0, 0)),
        scratch_shapes=[pltpu.VMEM((tm, 1), jnp.float32),   # per-row diff sum
                        pltpu.VMEM((tm, 1), jnp.float32)],  # per-row count
        compiler_params=pltpu.CompilerParams(
            dimension_semantics=("parallel", "arbitrary")),
    )(x, sq_i, t_i, x, sq_j, t_j)

    return jnp.abs(jnp.sum(partials[:, 0, 0]) * (1.0 / n))


def _tri_loss_ref(inputs, targets):
    """Pure-JAX reference of the same forward math (for validation)."""
    vis, vtm, nir, ntm = jnp.split(inputs.astype(jnp.float32), 4, axis=0)
    x = jnp.concatenate([vis, ntm], axis=0)
    n = x.shape[0]
    sq = jnp.sum(x * x, axis=1, keepdims=True)
    gram = jnp.dot(x, x.T, precision=jax.lax.Precision.HIGHEST)
    d2 = sq + sq.T - 2.0 * gram
    d2 = jnp.where(jnp.eye(n, dtype=bool), 0.0, d2)   # exact-arith diagonal
    dist_vm = jnp.sqrt(jnp.maximum(d2, 1e-12))
    dist_nm = jnp.sqrt(jnp.maximum(dist_vm, 1e-12))
    tt = targets.reshape(1, n)
    mask = (tt == tt.T).astype(jnp.float32)
    cnt = jnp.sum(mask, axis=1)
    ap2 = jnp.mean(jnp.sum(dist_vm * mask, axis=1) / cnt)
    ap3 = jnp.mean(jnp.sum(dist_nm * mask, axis=1) / cnt)
    return jnp.abs(ap2 - ap3)


if __name__ == "__main__":
    key = jax.random.PRNGKey(0)

    # (B, D, block_size):
    #   case 0: tiny single tile                     (n = 8)
    #   case 1: multi-tile, no padding               (n = 256, 2x2 grid)
    #   case 2: multi-tile with padded rows/cols     (n = 140 -> n_pad = 256)
    #   case 3: padded, feature dim not 128-aligned  (n = 200, d = 48)
    cases = [(4, 32, 256), (128, 32, 128), (70, 32, 128), (100, 48, 128)]
    for idx, (B, D, bs) in enumerate(cases):
        key, kx, kt = jax.random.split(key, 3)
        inputs = jax.random.normal(kx, (4 * B, D), dtype=jnp.float32)
        n = 2 * B
        targets = jax.random.randint(kt, (n,), 0, max(2, n // 4),
                                     dtype=jnp.int32)
        loss = tri_loss(inputs, targets, block_size=bs)
        jax.block_until_ready(loss)
        ref = _tri_loss_ref(inputs, targets)
        assert jnp.allclose(loss, ref, atol=1e-4, rtol=5e-4), (idx, loss, ref)

    print("KERNEL_OK")
</pallas_src>

<mosaic_0001>
module attributes {stable_mosaic.version = 11 : i64} {
  func.func @_tri_loss_kernel(%arg0: i32, %arg1: i32, %arg2: memref<8x32xf32, #tpu.memory_space<vmem>>, %arg3: memref<8x1xf32, #tpu.memory_space<vmem>>, %arg4: memref<8x1xi32, #tpu.memory_space<vmem>>, %arg5: memref<8x32xf32, #tpu.memory_space<vmem>>, %arg6: memref<1x8xf32, #tpu.memory_space<vmem>>, %arg7: memref<1x8xi32, #tpu.memory_space<vmem>>, %arg8: memref<1x8x128xf32, #tpu.memory_space<vmem>>, %arg9: memref<8x1xf32, #tpu.memory_space<vmem>>, %arg10: memref<8x1xf32, #tpu.memory_space<vmem>>) attributes {dimension_semantics = [#tpu.dimension_semantics<parallel>, #tpu.dimension_semantics<arbitrary>], iteration_bounds = array<i64: 1, 1>, scalar_prefetch = 0 : i64, scratch_operands = 2 : i64, tpu.core_type = #tpu.core_type<tc>, window_params = [{transform_indices = @transform_0, window_bounds = array<i64: 8, 32>}, {transform_indices = @transform_1, window_bounds = array<i64: 8, 1>}, {transform_indices = @transform_2, window_bounds = array<i64: 8, 1>}, {transform_indices = @transform_3, window_bounds = array<i64: 8, 32>}, {transform_indices = @transform_4, window_bounds = array<i64: 1, 8>}, {transform_indices = @transform_5, window_bounds = array<i64: 1, 8>}, {transform_indices = @transform_6, window_bounds = array<i64: 1, 8, 128>}]} {
    %c0_i32 = arith.constant 0 : i32
    %0 = arith.cmpi eq, %arg1, %c0_i32 : i32
    %1 = arith.extui %0 : i1 to i32
    %c0_i32_0 = arith.constant 0 : i32
    %2 = arith.cmpi ne, %1, %c0_i32_0 : i32
    scf.if %2 {
      %cst_30 = arith.constant 0.000000e+00 : f32
      %58 = vector.broadcast %cst_30 : f32 to vector<8x1xf32>
      %c0_31 = arith.constant 0 : index
      %c0_32 = arith.constant 0 : index
      %59 = vector.load %arg9[%c0_31, %c0_32] : memref<8x1xf32, #tpu.memory_space<vmem>>, vector<8x1xf32>
      tpu.vector_store %arg9[%c0_31, %c0_32], %58 {strides = array<i32>} : memref<8x1xf32, #tpu.memory_space<vmem>>, vector<8x1xf32>,
      %cst_33 = arith.constant 0.000000e+00 : f32
      %60 = vector.broadcast %cst_33 : f32 to vector<8x1xf32>
      %c0_34 = arith.constant 0 : index
      %c0_35 = arith.constant 0 : index
      %61 = vector.load %arg10[%c0_34, %c0_35] : memref<8x1xf32, #tpu.memory_space<vmem>>, vector<8x1xf32>
      tpu.vector_store %arg10[%c0_34, %c0_35], %60 {strides = array<i32>} : memref<8x1xf32, #tpu.memory_space<vmem>>, vector<8x1xf32>,
    } else {
    }
    %c0 = arith.constant 0 : index
    %c0_1 = arith.constant 0 : index
    %3 = vector.load %arg2[%c0, %c0_1] : memref<8x32xf32, #tpu.memory_space<vmem>>, vector<8x32xf32>
    %c0_2 = arith.constant 0 : index
    %c0_3 = arith.constant 0 : index
    %4 = vector.load %arg5[%c0_2, %c0_3] : memref<8x32xf32, #tpu.memory_space<vmem>>, vector<8x32xf32>
    %cst = arith.constant dense<0.000000e+00> : vector<8x8xf32>
    %5 = tpu.matmul %3, %4, %cst {dimension_numbers = #tpu.dot_dimension_numbers<[1], [1], [0], [0], [0, 0, 1, 0], [], []>} : vector<8x32xf32>, vector<8x32xf32>, vector<8x8xf32> -> vector<8x8xf32>
    %c0_4 = arith.constant 0 : index
    %c0_5 = arith.constant 0 : index
    %6 = vector.load %arg3[%c0_4, %c0_5] : memref<8x1xf32, #tpu.memory_space<vmem>>, vector<8x1xf32>
    %c0_6 = arith.constant 0 : index
    %c0_7 = arith.constant 0 : index
    %7 = vector.load %arg6[%c0_6, %c0_7] : memref<1x8xf32, #tpu.memory_space<vmem>>, vector<1x8xf32>
    %8 = vector.broadcast %6 : vector<8x1xf32> to vector<8x8xf32>
    %9 = vector.broadcast %7 : vector<1x8xf32> to vector<8x8xf32>
    %10 = arith.addf %8, %9 : vector<8x8xf32>
    %cst_8 = arith.constant 2.000000e+00 : f32
    %11 = vector.broadcast %cst_8 : f32 to vector<8x8xf32>
    %12 = arith.mulf %11, %5 : vector<8x8xf32>
    %13 = arith.subf %10, %12 : vector<8x8xf32>
    %c8_i32 = arith.constant 8 : i32
    %14 = arith.muli %arg0, %c8_i32 : i32
    %15 = tpu.iota {dimensions = array<i32: 0>} : vector<8x1xi32>
    %16 = vector.broadcast %14 : i32 to vector<8x1xi32>
    %17 = arith.addi %16, %15 : vector<8x1xi32>
    %c8_i32_9 = arith.constant 8 : i32
    %18 = arith.muli %arg1, %c8_i32_9 : i32
    %19 = tpu.iota {dimensions = array<i32: 1>} : vector<1x8xi32>
    %20 = vector.broadcast %18 : i32 to vector<1x8xi32>
    %21 = arith.addi %20, %19 : vector<1x8xi32>
    %22 = vector.broadcast %17 : vector<8x1xi32> to vector<8x8xi32>
    %23 = vector.broadcast %21 : vector<1x8xi32> to vector<8x8xi32>
    %24 = arith.cmpi eq, %22, %23 : vector<8x8xi32>
    %cst_10 = arith.constant 0.000000e+00 : f32
    %25 = vector.broadcast %cst_10 : f32 to vector<8x8xf32>
    %26 = arith.select %24, %25, %13 : vector<8x8xi1>, vector<8x8xf32>
    %cst_11 = arith.constant 9.99999996E-13 : f32
    %27 = vector.broadcast %cst_11 : f32 to vector<8x8xf32>
    %28 = arith.maximumf %26, %27 : vector<8x8xf32>
    %29 = math.sqrt %28 : vector<8x8xf32>
    %30 = math.sqrt %29 : vector<8x8xf32>
    %31 = arith.subf %29, %30 : vector<8x8xf32>
    %c0_12 = arith.constant 0 : index
    %c0_13 = arith.constant 0 : index
    %32 = vector.load %arg4[%c0_12, %c0_13] : memref<8x1xi32, #tpu.memory_space<vmem>>, vector<8x1xi32>
    %c0_14 = arith.constant 0 : index
    %c0_15 = arith.constant 0 : index
    %33 = vector.load %arg7[%c0_14, %c0_15] : memref<1x8xi32, #tpu.memory_space<vmem>>, vector<1x8xi32>
    %34 = vector.broadcast %32 : vector<8x1xi32> to vector<8x8xi32>
    %35 = vector.broadcast %33 : vector<1x8xi32> to vector<8x8xi32>
    %36 = arith.cmpi eq, %34, %35 : vector<8x8xi32>
    %c8_i32_16 = arith.constant 8 : i32
    %37 = vector.broadcast %c8_i32_16 : i32 to vector<1x8xi32>
    %38 = arith.cmpi slt, %21, %37 : vector<1x8xi32>
    %39 = vector.broadcast %38 : vector<1x8xi1> to vector<8x8xi1>
    %40 = arith.andi %36, %39 : vector<8x8xi1>
    %c0_17 = arith.constant 0 : index
    %c0_18 = arith.constant 0 : index
    %41 = vector.load %arg10[%c0_17, %c0_18] : memref<8x1xf32, #tpu.memory_space<vmem>>, vector<8x1xf32>
    %42 = arith.extui %40 : vector<8x8xi1> to vector<8x8xi32>
    %43 = arith.sitofp %42 : vector<8x8xi32> to vector<8x8xf32>
    %cst_19 = arith.constant dense<0.000000e+00> : vector<8xf32>
    %44 = vector.multi_reduction <add>, %43, %cst_19 [1] : vector<8x8xf32> to vector<8xf32>
    %45 = vector.shape_cast %44 : vector<8xf32> to vector<8x1xf32>
    %46 = arith.addf %41, %45 : vector<8x1xf32>
    %c0_20 = arith.constant 0 : index
    %c0_21 = arith.constant 0 : index
    %47 = vector.load %arg10[%c0_20, %c0_21] : memref<8x1xf32, #tpu.memory_space<vmem>>, vector<8x1xf32>
    tpu.vector_store %arg10[%c0_20, %c0_21], %46 {strides = array<i32>} : memref<8x1xf32, #tpu.memory_space<vmem>>, vector<8x1xf32>,
    %c0_22 = arith.constant 0 : index
    %c0_23 = arith.constant 0 : index
    %48 = vector.load %arg9[%c0_22, %c0_23] : memref<8x1xf32, #tpu.memory_space<vmem>>, vector<8x1xf32>
    %cst_24 = arith.constant 0.000000e+00 : f32
    %49 = vector.broadcast %cst_24 : f32 to vector<8x8xf32>
    %50 = arith.select %40, %31, %49 : vector<8x8xi1>, vector<8x8xf32>
    %cst_25 = arith.constant dense<0.000000e+00> : vector<8xf32>
    %51 = vector.multi_reduction <add>, %50, %cst_25 [1] : vector<8x8xf32> to vector<8xf32>
    %52 = vector.shape_cast %51 : vector<8xf32> to vector<8x1xf32>
    %53 = arith.addf %48, %52 : vector<8x1xf32>
    %c0_26 = arith.constant 0 : index
    %c0_27 = arith.constant 0 : index
    %54 = vector.load %arg9[%c0_26, %c0_27] : memref<8x1xf32, #tpu.memory_space<vmem>>, vector<8x1xf32>
    tpu.vector_store %arg9[%c0_26, %c0_27], %53 {strides = array<i32>} : memref<8x1xf32, #tpu.memory_space<vmem>>, vector<8x1xf32>,
    %c0_i32_28 = arith.constant 0 : i32
    %55 = arith.cmpi eq, %arg1, %c0_i32_28 : i32
    %56 = arith.extui %55 : i1 to i32
    %c0_i32_29 = arith.constant 0 : i32
    %57 = arith.cmpi ne, %56, %c0_i32_29 : i32
    scf.if %57 {
      %c0_30 = arith.constant 0 : index
      %c0_31 = arith.constant 0 : index
      %58 = vector.load %arg9[%c0_30, %c0_31] : memref<8x1xf32, #tpu.memory_space<vmem>>, vector<8x1xf32>
      %c0_32 = arith.constant 0 : index
      %c0_33 = arith.constant 0 : index
      %59 = vector.load %arg10[%c0_32, %c0_33] : memref<8x1xf32, #tpu.memory_space<vmem>>, vector<8x1xf32>
      %cst_34 = arith.constant 1.000000e+00 : f32
      %60 = vector.broadcast %cst_34 : f32 to vector<8x1xf32>
      %61 = arith.maximumf %59, %60 : vector<8x1xf32>
      %62 = arith.divf %58, %61 : vector<8x1xf32>
      %c8_i32_35 = arith.constant 8 : i32
      %63 = vector.broadcast %c8_i32_35 : i32 to vector<8x1xi32>
      %64 = arith.cmpi slt, %17, %63 : vector<8x1xi32>
      %cst_36 = arith.constant 0.000000e+00 : f32
      %65 = vector.broadcast %cst_36 : f32 to vector<8x1xf32>
      %66 = arith.select %64, %62, %65 : vector<8x1xi1>, vector<8x1xf32>
      %67 = vector.shape_cast %66 : vector<8x1xf32> to vector<1x8x1xf32>
      %cst_37 = arith.constant dense<0.000000e+00> : vector<1xf32>
      %68 = vector.multi_reduction <add>, %67, %cst_37 [1, 2] : vector<1x8x1xf32> to vector<1xf32>
      %69 = vector.shape_cast %68 : vector<1xf32> to vector<1x1x1xf32>
      %70 = vector.extract %69[0, 0, 0] : f32 from vector<1x1x1xf32>
      %71 = vector.broadcast %70 : f32 to vector<1x8x128xf32>
      %c0_38 = arith.constant 0 : index
      %c0_39 = arith.constant 0 : index
      %c0_40 = arith.constant 0 : index
      %72 = vector.load %arg8[%c0_38, %c0_39, %c0_40] : memref<1x8x128xf32, #tpu.memory_space<vmem>>, vector<1x8x128xf32>
      tpu.vector_store %arg8[%c0_38, %c0_39, %c0_40], %71 {strides = array<i32>} : memref<1x8x128xf32, #tpu.memory_space<vmem>>, vector<1x8x128xf32>,
    } else {
    }
    return
  }
  func.func @transform_0(%arg0: i32, %arg1: i32) -> (i32, i32) {
    %c0_i32 = arith.constant 0 : i32
    %c0_i32_0 = arith.constant 0 : i32
    return %arg0, %c0_i32 : i32, i32
  }
  func.func @transform_1(%arg0: i32, %arg1: i32) -> (i32, i32) {
    %c0_i32 = arith.constant 0 : i32
    %c0_i32_0 = arith.constant 0 : i32
    return %arg0, %c0_i32 : i32, i32
  }
  func.func @transform_2(%arg0: i32, %arg1: i32) -> (i32, i32) {
    %c0_i32 = arith.constant 0 : i32
    %c0_i32_0 = arith.constant 0 : i32
    return %arg0, %c0_i32 : i32, i32
  }
  func.func @transform_3(%arg0: i32, %arg1: i32) -> (i32, i32) {
    %c0_i32 = arith.constant 0 : i32
    %c0_i32_0 = arith.constant 0 : i32
    return %arg1, %c0_i32 : i32, i32
  }
  func.func @transform_4(%arg0: i32, %arg1: i32) -> (i32, i32) {
    %c0_i32 = arith.constant 0 : i32
    %c0_i32_0 = arith.constant 0 : i32
    return %c0_i32, %arg1 : i32, i32
  }
  func.func @transform_5(%arg0: i32, %arg1: i32) -> (i32, i32) {
    %c0_i32 = arith.constant 0 : i32
    %c0_i32_0 = arith.constant 0 : i32
    return %c0_i32, %arg1 : i32, i32
  }
  func.func @transform_6(%arg0: i32, %arg1: i32) -> (i32, i32, i32) {
    %c0_i32 = arith.constant 0 : i32
    %c0_i32_0 = arith.constant 0 : i32
    %c0_i32_1 = arith.constant 0 : i32
    return %arg0, %c0_i32, %c0_i32_0 : i32, i32, i32
  }
}

</mosaic_0001>

<llo_original>
// kernel: tpu_custom_call.1
$region0: #{tpu_custom_call.1}
  #allocation0 [shape = 'u32[]', space=smem, size = 0x4, offset = 0x4, fixed_abs, tag = 'smem constant byte address 0x4 - core index']
  #allocation1 [shape = 'u32[144,128]{1,0:T(1,128)}', space=vmem, size = 0x12000, scoped, tag = 'internal scratch']
  #allocation2 [shape = 'f32[8,1]{1,0:T(8,128)}', space=vmem, size = 0x1000, scoped, tag = 'scratch operand']
  #allocation3 [shape = 'f32[8,1]{1,0:T(8,128)}', space=vmem, size = 0x1000, scoped, tag = 'scratch operand']
  %s0 = inlined_call_operand.vmem [shape: f32[8,32], index: 0, kind: input, shape index: {}]
  %s1 = inlined_call_operand.vmem [shape: f32[8,1], index: 1, kind: input, shape index: {}]
  %s2 = inlined_call_operand.vmem [shape: s32[8,1], index: 2, kind: input, shape index: {}]
  %s3 = inlined_call_operand.vmem [shape: f32[8,32], index: 3, kind: input, shape index: {}]
  %s4 = inlined_call_operand.vmem [shape: f32[1,8], index: 4, kind: input, shape index: {}]
  %s5 = inlined_call_operand.vmem [shape: s32[1,8], index: 5, kind: input, shape index: {}]
  %s6 = inlined_call_operand.hbm [shape: f32[1,8,128], index: 6, kind: output, shape index: {}]
  %s7 = sld [smem:[#allocation0]]
  $region42: #{tpu_custom_call.1} parent=0
    _
  %s9 = ssub.s32 1, %s7
  %s10 = scalar_select 0, %s9, %s7
  $region1: #{tpu_custom_call.1} parent=0
    #allocation4 [shape = 'u8[4096]{0}', space=vmem, size = 0x1000, scoped, tag = 'output window, operand 0, single buffered']
    #allocation5 [shape = 's32[1]{0}', space=sflag, size = 0x4, scoped, tag = 'scoped memory for tpu_custom_call.1']
    %11 = vsyncpa [#allocation5], 0
    // Predicated region
    $region2: #{tpu_custom_call.1} parent=1 // pred_check
      _
    $region3: #{tpu_custom_call.1} parent=1 // pred_check_branch
      %13 = sbr.rel (0) target = $region5
    $region4: #{tpu_custom_call.1} parent=1 // pred_region
      _
    $region5: #{tpu_custom_call.1} parent=1 // pred_fallthru
      _
    // Predicated region
    $region6: #{tpu_custom_call.1} parent=1 // pred_check
      _
    $region7: #{tpu_custom_call.1} parent=1 // pred_check_branch
      %15 = sbr.rel (0) target = $region9
    $region8: #{tpu_custom_call.1} parent=1 // pred_region
      _
    $region9: #{tpu_custom_call.1} parent=1 // pred_fallthru
      _
    // Predicated region
    $region10: #{tpu_custom_call.1} parent=1 // pred_check
      _
    $region11: #{tpu_custom_call.1} parent=1 // pred_check_branch
      %17 = sbr.rel (0) target = $region13
    $region12: #{tpu_custom_call.1} parent=1 // pred_region
      _
    $region13: #{tpu_custom_call.1} parent=1 // pred_fallthru
      _
    // Predicated region
    $region14: #{tpu_custom_call.1} parent=1 // pred_check
      _
    $region15: #{tpu_custom_call.1} parent=1 // pred_check_branch
      %19 = sbr.rel (0) target = $region17
    $region16: #{tpu_custom_call.1} parent=1 // pred_region
      _
    $region17: #{tpu_custom_call.1} parent=1 // pred_fallthru
      _
    // Predicated region
    $region18: #{tpu_custom_call.1} parent=1 // pred_check
      _
    $region19: #{tpu_custom_call.1} parent=1 // pred_check_branch
      %21 = sbr.rel (0) target = $region21
    $region20: #{tpu_custom_call.1} parent=1 // pred_region
      _
    $region21: #{tpu_custom_call.1} parent=1 // pred_fallthru
      _
    // Predicated region
    $region22: #{tpu_custom_call.1} parent=1 // pred_check
      _
    $region23: #{tpu_custom_call.1} parent=1 // pred_check_branch
      %23 = sbr.rel (0) target = $region25
    $region24: #{tpu_custom_call.1} parent=1 // pred_region
      _
    $region25: #{tpu_custom_call.1} parent=1 // pred_fallthru
      _
    %p24 = scmp.eq.s32.totalorder 0, 0
    // Predicated region
    $region26: #{tpu_custom_call.1} parent=1 // pred_check
      %p25 = pneg %p24
    $region27: #{tpu_custom_call.1} parent=1 // pred_check_branch
      %27 = sbr.rel (%p25) target = $region29
    $region28: #{tpu_custom_call.1} parent=1 // pred_region
      %vm28 = vcmask 7168
      %29 = vst.msk [vmem:[#allocation2] sm:$0xff] %vm28, 0.0
      %30 = vst.msk [vmem:[#allocation3] sm:$0xff] %vm28, 0.0
    $region29: #{tpu_custom_call.1} parent=1 // pred_fallthru
      _
    %v31 = vld [vmem:[%s0] sm:$0xff]
    %v32 = vld [vmem:[%s3] sm:$0xff]
    %vm33 = vcmask 261120
    %v35 = vsel %vm33, %v31, 0
    %v38 = vsel %vm33, %v32, 0
    %40 = vmatprep.subr.mxu0 0.0
    %41 = vmatpush1.xpose.msra.mxu0 0.0
    %42 = vmatprep.subr.mxu0 0.0
    %43 = vmatpush1.xpose.msra.mxu0 0.0
    %44 = vmatprep.subr.mxu0 0.0
    %45 = vmatpush1.xpose.msra.mxu0 0.0
    %46 = vmatprep.subr.mxu0 0.0
    %47 = vmatpush1.xpose.msra.mxu0 0.0
    %48 = vmatprep.subr.mxu0 0.0
    %49 = vmatpush1.xpose.msra.mxu0 0.0
    %50 = vmatprep.subr.mxu0 0.0
    %51 = vmatpush1.xpose.msra.mxu0 0.0
    %52 = vmatprep.subr.mxu0 0.0
    %53 = vmatpush1.xpose.msra.mxu0 0.0
    %54 = vmatprep.subr.mxu0 0.0
    %55 = vmatpush1.xpose.msra.mxu0 0.0
    %56 = vmatprep.subr.mxu0 0.0
    %57 = vmatpush1.xpose.msra.mxu0 0.0
    %58 = vmatprep.subr.mxu0 0.0
    %59 = vmatpush1.xpose.msra.mxu0 0.0
    %60 = vmatprep.subr.mxu0 0.0
    %61 = vmatpush1.xpose.msra.mxu0 0.0
    %62 = vmatprep.subr.mxu0 0.0
    %63 = vmatpush1.xpose.msra.mxu0 0.0
    %64 = vmatprep.subr.mxu0 0.0
    %65 = vmatpush1.xpose.msra.mxu0 0.0
    %66 = vmatprep.subr.mxu0 0.0
    %67 = vmatpush1.xpose.msra.mxu0 0.0
    %68 = vmatprep.subr.mxu0 0.0
    %69 = vmatpush1.xpose.msra.mxu0 0.0
    %70 = vmatprep.subr.mxu0 0.0
    %71 = vmatpush1.xpose.msra.mxu0 %v38
    %72 = vmatprep.subr.mxu0 0.0
    %73 = vmatpush2.xpose.msra.mxu0 0.0
    %74 = vmatprep.subr.mxu0 0.0
    %75 = vmatpush2.xpose.msra.mxu0 0.0
    %76 = vmatprep.subr.mxu0 0.0
    %77 = vmatpush2.xpose.msra.mxu0 0.0
    %78 = vmatprep.subr.mxu0 0.0
    %79 = vmatpush2.xpose.msra.mxu0 0.0
    %80 = vmatprep.subr.mxu0 0.0
    %81 = vmatpush2.xpose.msra.mxu0 0.0
    %82 = vmatprep.subr.mxu0 0.0
    %83 = vmatpush2.xpose.msra.mxu0 0.0
    %84 = vmatprep.subr.mxu0 0.0
    %85 = vmatpush2.xpose.msra.mxu0 0.0
    %86 = vmatprep.subr.mxu0 0.0
    %87 = vmatpush2.xpose.msra.mxu0 0.0
    %88 = vmatprep.subr.mxu0 0.0
    %89 = vmatpush2.xpose.msra.mxu0 0.0
    %90 = vmatprep.subr.mxu0 0.0
    %91 = vmatpush2.xpose.msra.mxu0 0.0
    %92 = vmatprep.subr.mxu0 0.0
    %93 = vmatpush2.xpose.msra.mxu0 0.0
    %94 = vmatprep.subr.mxu0 0.0
    %95 = vmatpush2.xpose.msra.mxu0 0.0
    %96 = vmatprep.subr.mxu0 0.0
    %97 = vmatpush2.xpose.msra.mxu0 0.0
    %98 = vmatprep.subr.mxu0 0.0
    %99 = vmatpush2.xpose.msra.mxu0 0.0
    %100 = vmatprep.subr.mxu0 0.0
    %101 = vmatpush2.xpose.msra.mxu0 0.0
    %102 = vmatprep.subr.mxu0 0.0
    %103 = vmatpush2.xpose.msra.mxu0 0.0
    %104 = vmatprep.mubr.f32.mxu0 0.0
    %105 = vmatmul.mubr.f32.gmra.mxu0 %v35
    %v106 = vpop.f32.mrf.mxu0
    %v107 = vadd.f32 0.0, %v106
    %v108 = vpop.f32.mrf.mxu0
    %109 = vdwg.mxu0
    %v110 = vld [vmem:[%s1] sm:$0xff]
    %v111 = vld [vmem:[%s4] sm:$0x1]
    %113 = vset.pattern.permute.xlu0 0
    %114 = vperm.xlu0 %113, %v110
    %v115 = vpop.permute.xlu0 %114
    %v118 = vlaneseq
    %v119 = vshrl.u32 %v118, 7
    %v120 = vsub.s32 0, %v119
    %v121 = vrot.slane %v111, %v120
    %v123 = vadd.f32 %v115, %v121
    %v124 = vmul.f32 %v107, 2.0
    %v125 = vsub.f32 %v123, %v124
    %s126 = smul.u32 0, 8
    %v127 = vlaneseq
    %v128 = vshrl.u32 %v127, 7
    %v129 = vstv %s126
    %v130 = vadd.s32 %v129, %v128
    %s131 = smul.u32 0, 8
    %v132 = vlaneseq
    %v133 = vand.u32 %v132, 127
    %v134 = vstv %s131
    %v135 = vadd.s32 %v134, %v133
    %vm136 = vcmp.eq.s32.totalorder %v130, %v135
    %v137 = vsel %vm136, 0.0, %v125
    %v138 = vmax.f32 %v137, 1e-12
    %v139 = vrsqrt.pop %v138
    %v140 = vmul.f32 %v138, %v139
    %vm141 = vcmp.eq.f32.partialorder %v138, inf
    %v142 = vsel %vm141, %v138, %v140
    %vm143 = vcmp.eq.f32.partialorder %v138, 0.0
    %v144 = vand.u32 %v138, 2147483648
    %v145 = vsel %vm143, %v144, %v142
    %v146 = vrsqrt.pop %v145
    %v147 = vmul.f32 %v145, %v146
    %vm148 = vcmp.eq.f32.partialorder %v145, inf
    %v149 = vsel %vm148, %v145, %v147
    %vm150 = vcmp.eq.f32.partialorder %v145, 0.0
    %v151 = vand.u32 %v145, 2147483648
    %v152 = vsel %vm150, %v151, %v149
    %v153 = vsub.f32 %v145, %v152
    %v154 = vld [vmem:[%s2] sm:$0xff]
    %v155 = vld [vmem:[%s5] sm:$0x1]
    %156 = vset.pattern.permute.xlu0 0
    %157 = vperm.xlu0 %156, %v154
    %v158 = vpop.permute.xlu0 %157
    %v159 = vlaneseq
    %v160 = vshrl.u32 %v159, 7
    %v161 = vsub.s32 0, %v160
    %v162 = vrot.slane %v155, %v161
    %vm163 = vcmp.eq.s32.totalorder %v158, %v162
    %vm164 = vcmp.lt.s32.totalorder %v135, 8
    %v165 = vsel %vm164, 1, 0
    %vm166 = vcmp.eq.s32.totalorder %v165, 1
    %vm167 = vmand %vm163, %vm166
    %v168 = vld [vmem:[#allocation3] sm:$0xff]
    %v169 = vsel %vm167, 1, 0
    %v170 = vcvt.s32.f32 %v169
    %vm171 = vcmask 64512
    %v172 = vsel %vm171, %v170, 0.0
    %173 = vadd.xlane.f32.xlu0 %v172
    %v174 = vpop.xlane.xlu0 %173
    %v175 = vadd.f32 %v168, %v174
    %vm176 = vcmask 7168
    %177 = vst.msk [vmem:[#allocation3] sm:$0xff] %vm176, %v175
    %v178 = vld [vmem:[#allocation2] sm:$0xff]
    %v179 = vsel %vm167, %v153, 0.0
    %v180 = vsel %vm171, %v179, 0.0
    %181 = vadd.xlane.f32.xlu0 %v180
    %v182 = vpop.xlane.xlu0 %181
    %v183 = vadd.f32 %v178, %v182
    %184 = vst.msk [vmem:[#allocation2] sm:$0xff] %vm176, %v183
    // Predicated region
    $region30: #{tpu_custom_call.1} parent=1 // pred_check
      %p185 = pneg %p24
    $region31: #{tpu_custom_call.1} parent=1 // pred_check_branch
      %187 = sbr.rel (%p185) target = $region33
    $region32: #{tpu_custom_call.1} parent=1 // pred_region
      %v188 = vld [vmem:[#allocation2] sm:$0xff]
      %v189 = vld [vmem:[#allocation3] sm:$0xff]
      %v190 = vmax.f32 %v189, 1.0
      %v191 = vrcp.pop %v190
      %v192 = vmul.f32 %v188, %v191
      %vm193 = vcmp.lt.s32.totalorder %v130, 8
      %v194 = vsel %vm193, %v192, 0.0
      %v195 = vsel %vm176, %v194, 0.0
      %196 = vadd.xlane.f32.xlu0 %v195
      %v197 = vpop.xlane.xlu0 %196
      %v198 = vrot.slane %v197, 4
      %v199 = vadd.f32 %v197, %v198
      %v200 = vrot.slane %v199, 2
      %v201 = vadd.f32 %v199, %v200
      %v202 = vrot.slane %v201, 1
      %v203 = vadd.f32 %v201, %v202
      %s204 = vtos %v203
      %v205 = vstv %s204
      %206 = vst [vmem:[#allocation4] sm:$0xff] %v205
    $region33: #{tpu_custom_call.1} parent=1 // pred_fallthru
      _
    // Predicated region
    $region34: #{tpu_custom_call.1} parent=1 // pred_check
      _
    $region35: #{tpu_custom_call.1} parent=1 // pred_check_branch
      %208 = sbr.rel (0) target = $region37
    $region36: #{tpu_custom_call.1} parent=1 // pred_region
      %s210 = ssub.s32 128, 128
      %211 = vsyncadd [#allocation5], %s210
      %s213 = sshll.u32 [#allocation4], 4
      %s214 = int_to_ptr.vmem [resolvable:$true] %s213
      %216 = dma.vmem_to_hbm [thread:$0]  %s214, 128, %s6, [#allocation5]
    $region37: #{tpu_custom_call.1} parent=1 // pred_fallthru
      _
    // Predicated region
    $region38: #{tpu_custom_call.1} parent=1 // pred_check
      _
    $region39: #{tpu_custom_call.1} parent=1 // pred_check_branch
      %218 = sbr.rel (0) target = $region41
    $region40: #{tpu_custom_call.1} parent=1 // pred_region
      %219 = dma.done [#allocation5], 128
    $region41: #{tpu_custom_call.1} parent=1 // pred_fallthru
      _
    %220 = vsyncpa [#allocation5], 1

</llo_original>
